<compile_context>
chip_gen: v5e
topology: v5e:2x2
jax: 0.10.0
libtpu: 0.0.40
codegen_flags: <defaults>
</compile_context>

<pallas_src>
import functools

import jax
import jax.numpy as jnp
from jax.experimental import pallas as pl
from jax.experimental.pallas import tpu as pltpu

INPUT_DIM = 2
OUTPUT_DIM = 1
HIDDEN_LAYERS = 5
LAYER_SIZE = 20


def _swish(z):
    # z * sigmoid(z) == 0.5 * z * (1 + tanh(0.5 * z))
    # Single EUP op (tanh); the 0.5*(1+...) arithmetic rides the idle VALU slots.
    return 0.5 * z * (1.0 + jnp.tanh(0.5 * z))


def ffn_kernel(x_ref, win_ref, bin_ref, wh_ref, bh_ref, wout_ref, bout_ref, o_ref):
    # x_ref:    (INPUT_DIM, tm)                     feature-major input tile (f32)
    # win_ref:  (LAYER_SIZE, INPUT_DIM)             input-layer weight, transposed (f32)
    # bin_ref:  (LAYER_SIZE, 1)                     (f32)
    # wh_ref:   (LAYER_SIZE, HIDDEN_LAYERS*LAYER_SIZE)  lane-packed hidden weights (bf16)
    # bh_ref:   (LAYER_SIZE, HIDDEN_LAYERS)         lane-packed hidden biases (f32)
    # wout_ref: (LAYER_SIZE, OUTPUT_DIM)            (f32)
    # bout_ref: (OUTPUT_DIM, 1)                     (f32)
    # o_ref:    (OUTPUT_DIM, tm)                    feature-major, lane-dense output
    x = x_ref[...]                                        # (2, tm)

    # Input layer: (20,2)@(2,tm) with K=2 -> two broadcast FMAs on the VPU
    # instead of a <2%-utilized MXU pass.
    pre = bin_ref[...]                                    # (20, 1), broadcasts up
    for k in range(INPUT_DIM):
        pre = pre + win_ref[:, k : k + 1] * x[k : k + 1, :]
    h = _swish(pre)                                       # (20, tm) f32

    # Hidden layers: (20,20)@(20,tm) MXU matmuls, statically unrolled.
    # bf16 operands, f32 accumulation.
    w_all = wh_ref[...]                                   # (20, 100) bf16, one load
    b_all = bh_ref[...]                                   # (20, 5)   f32, one load
    for l in range(HIDDEN_LAYERS):
        w_l = w_all[:, l * LAYER_SIZE : (l + 1) * LAYER_SIZE]   # (20, 20) bf16
        z = (
            jnp.dot(w_l, h.astype(jnp.bfloat16), preferred_element_type=jnp.float32)
            + b_all[:, l : l + 1]
        )
        h = _swish(z)

    # Output layer: (1,20)@(20,tm) with M=1 -> elementwise multiply + sublane
    # reduction (VPU + XLU) instead of a near-empty MXU pass.  The (1, tm)
    # result is a fully lane-dense store.
    o_ref[...] = jnp.sum(wout_ref[...] * h, axis=0, keepdims=True) + bout_ref[...]


def _round_up(v, m):
    return ((v + m - 1) // m) * m


@functools.partial(jax.jit, static_argnames=("tm",))
def ffn_forward(x, w_in, b_in, w_h, b_h, w_out, b_out, *, tm=None):
    """x: (n, INPUT_DIM) -> (n, OUTPUT_DIM); matches the PyTorch FFN.forward."""
    n = x.shape[0]
    if tm is None:
        # Scale the batch tile with n:
        #  * cdiv(n, 2): at least 2 grid steps so both v7x TensorCores get work
        #    (and the step count stays even-ish for core balance),
        #  * 256 granularity: full MXU N-pass on v6e/v7x, lane-dense everywhere,
        #  * 4096 cap: amortizes the ~0.35 us/step pipeline overhead while
        #    keeping per-step VMEM around 1-2 MiB (<< every generation's limit).
        tm = max(256, min(4096, _round_up(-(-n // 2), 256)))
    assert tm % 128 == 0, "tm must be a multiple of 128 (lane-dense tiles)"
    n_pad = _round_up(n, tm)

    # One-time layout plumbing in the wrapper (tiny XLA ops outside the kernel):
    # feature-major activations, transposed + lane-packed weights, column biases.
    x_t = jnp.transpose(x).astype(jnp.float32)            # (INPUT_DIM, n)
    if n_pad != n:
        x_t = jnp.pad(x_t, ((0, 0), (0, n_pad - n)))
    w_in_t = jnp.transpose(w_in).astype(jnp.float32)       # (LAYER_SIZE, INPUT_DIM)
    b_in_c = b_in.reshape(LAYER_SIZE, 1).astype(jnp.float32)
    # (H, in, out) -> (out, H, in) -> (out, H*in); layer l sits at lanes [20l, 20l+20)
    w_h_p = (
        jnp.transpose(w_h, (2, 0, 1))
        .reshape(LAYER_SIZE, HIDDEN_LAYERS * LAYER_SIZE)
        .astype(jnp.bfloat16)                              # bf16 MXU operands
    )
    b_h_p = jnp.transpose(b_h).astype(jnp.float32)          # (LAYER_SIZE, HIDDEN_LAYERS)
    w_out_c = w_out.reshape(LAYER_SIZE, OUTPUT_DIM).astype(jnp.float32)
    b_out_c = b_out.reshape(OUTPUT_DIM, 1).astype(jnp.float32)

    grid = (n_pad // tm,)

    weight_bytes = (
        4 * (INPUT_DIM * LAYER_SIZE + LAYER_SIZE)
        + 2 * HIDDEN_LAYERS * LAYER_SIZE * LAYER_SIZE
        + 4 * HIDDEN_LAYERS * LAYER_SIZE
        + 4 * (LAYER_SIZE * OUTPUT_DIM + OUTPUT_DIM)
    )
    cost = pl.CostEstimate(
        flops=2 * n_pad * (
            INPUT_DIM * LAYER_SIZE
            + HIDDEN_LAYERS * LAYER_SIZE * LAYER_SIZE
            + LAYER_SIZE * OUTPUT_DIM
        ),
        # One tanh per activation element (tanh-form Swish).
        transcendentals=(HIDDEN_LAYERS + 1) * n_pad * LAYER_SIZE,
        bytes_accessed=4 * n_pad * (INPUT_DIM + OUTPUT_DIM) + weight_bytes,
    )

    out_t = pl.pallas_call(
        ffn_kernel,
        out_shape=jax.ShapeDtypeStruct((OUTPUT_DIM, n_pad), jnp.float32),
        grid_spec=pltpu.PrefetchScalarGridSpec(
            num_scalar_prefetch=0,
            grid=grid,
            in_specs=[
                pl.BlockSpec((INPUT_DIM, tm), lambda i: (0, i)),
                pl.BlockSpec((LAYER_SIZE, INPUT_DIM), lambda i: (0, 0)),
                pl.BlockSpec((LAYER_SIZE, 1), lambda i: (0, 0)),
                pl.BlockSpec(
                    (LAYER_SIZE, HIDDEN_LAYERS * LAYER_SIZE), lambda i: (0, 0)
                ),
                pl.BlockSpec((LAYER_SIZE, HIDDEN_LAYERS), lambda i: (0, 0)),
                pl.BlockSpec((LAYER_SIZE, OUTPUT_DIM), lambda i: (0, 0)),
                pl.BlockSpec((OUTPUT_DIM, 1), lambda i: (0, 0)),
            ],
            out_specs=pl.BlockSpec((OUTPUT_DIM, tm), lambda i: (0, i)),
        ),
        compiler_params=pltpu.CompilerParams(dimension_semantics=("parallel",)),
        cost_estimate=cost,
    )(x_t, w_in_t, b_in_c, w_h_p, b_h_p, w_out_c, b_out_c)

    return jnp.transpose(out_t[:, :n])                    # (n, OUTPUT_DIM)


def ffn_reference(x, w_in, b_in, w_h, b_h, w_out, b_out):
    """Pure-JAX f32 reference mirroring the PyTorch module exactly."""
    h = x @ w_in + b_in
    h = h * jax.nn.sigmoid(h)
    for l in range(HIDDEN_LAYERS):
        h = h @ w_h[l] + b_h[l]
        h = h * jax.nn.sigmoid(h)
    return h @ w_out + b_out


def init_params(key):
    """Deterministic synthetic parameter init (PyTorch-Linear-like uniform)."""
    keys = jax.random.split(key, 2 * (HIDDEN_LAYERS + 2))

    def linear(kw, kb, fan_in, fan_out):
        bound = 1.0 / jnp.sqrt(fan_in)
        w = jax.random.uniform(
            kw, (fan_in, fan_out), jnp.float32, minval=-bound, maxval=bound
        )
        b = jax.random.uniform(
            kb, (fan_out,), jnp.float32, minval=-bound, maxval=bound
        )
        return w, b

    w_in, b_in = linear(keys[0], keys[1], INPUT_DIM, LAYER_SIZE)
    w_hs, b_hs = [], []
    for l in range(HIDDEN_LAYERS):
        w, b = linear(keys[2 + 2 * l], keys[3 + 2 * l], LAYER_SIZE, LAYER_SIZE)
        w_hs.append(w)
        b_hs.append(b)
    w_h = jnp.stack(w_hs, axis=0)                          # (5, 20, 20)
    b_h = jnp.stack(b_hs, axis=0)                          # (5, 20)
    w_out, b_out = linear(keys[-2], keys[-1], LAYER_SIZE, OUTPUT_DIM)
    return w_in, b_in, w_h, b_h, w_out, b_out


if __name__ == "__main__":
    key = jax.random.PRNGKey(0)
    k_x, k_p = jax.random.split(key)

    # Small, non-tile-aligned batch: exercises padding and the auto tile
    # selection (tm=256 -> 2 grid steps, so both v7x TensorCores get work).
    batch = 300
    x = jax.random.normal(k_x, (batch, INPUT_DIM), jnp.float32)
    params = init_params(k_p)

    out = jax.block_until_ready(ffn_forward(x, *params))

    ref = ffn_reference(x, *params)
    assert out.shape == (batch, OUTPUT_DIM)
    err = float(jnp.max(jnp.abs(out - ref)))
    # Exact tanh-based Swish; only bf16 MXU operands (f32 accumulation, K=20)
    # differ from the f32 reference -> observed error is a few e-3.
    assert err < 1e-2, f"max abs err {err}"

    print("KERNEL_OK")
</pallas_src>

<mosaic_0001>
module attributes {stable_mosaic.version = 11 : i64} {
  func.func @ffn_kernel(%arg0: i32, %arg1: memref<2x256xf32, #tpu.memory_space<vmem>>, %arg2: memref<20x2xf32, #tpu.memory_space<vmem>>, %arg3: memref<20x1xf32, #tpu.memory_space<vmem>>, %arg4: memref<20x100xbf16, #tpu.memory_space<vmem>>, %arg5: memref<20x5xf32, #tpu.memory_space<vmem>>, %arg6: memref<20x1xf32, #tpu.memory_space<vmem>>, %arg7: memref<1x1xf32, #tpu.memory_space<vmem>>, %arg8: memref<1x256xf32, #tpu.memory_space<vmem>>) attributes {dimension_semantics = [#tpu.dimension_semantics<parallel>], iteration_bounds = array<i64: 2>, scalar_prefetch = 0 : i64, scratch_operands = 0 : i64, tpu.core_type = #tpu.core_type<tc>, window_params = [{transform_indices = @transform_0, window_bounds = array<i64: 2, 256>}, {pipeline_mode = #tpu.pipeline_mode<synchronous>, transform_indices = @transform_1, window_bounds = array<i64: 20, 2>}, {pipeline_mode = #tpu.pipeline_mode<synchronous>, transform_indices = @transform_2, window_bounds = array<i64: 20, 1>}, {pipeline_mode = #tpu.pipeline_mode<synchronous>, transform_indices = @transform_3, window_bounds = array<i64: 20, 100>}, {pipeline_mode = #tpu.pipeline_mode<synchronous>, transform_indices = @transform_4, window_bounds = array<i64: 20, 5>}, {pipeline_mode = #tpu.pipeline_mode<synchronous>, transform_indices = @transform_5, window_bounds = array<i64: 20, 1>}, {pipeline_mode = #tpu.pipeline_mode<synchronous>, transform_indices = @transform_6, window_bounds = array<i64: 1, 1>}, {transform_indices = @transform_7, window_bounds = array<i64: 1, 256>}]} {
    %c0 = arith.constant 0 : index
    %c0_0 = arith.constant 0 : index
    %0 = vector.load %arg1[%c0, %c0_0] : memref<2x256xf32, #tpu.memory_space<vmem>>, vector<2x256xf32>
    %c0_1 = arith.constant 0 : index
    %c0_2 = arith.constant 0 : index
    %1 = vector.load %arg3[%c0_1, %c0_2] : memref<20x1xf32, #tpu.memory_space<vmem>>, vector<20x1xf32>
    %c0_3 = arith.constant 0 : index
    %c0_4 = arith.constant 0 : index
    %2 = vector.load %arg2[%c0_3, %c0_4] : memref<20x2xf32, #tpu.memory_space<vmem>>, vector<20x1xf32>
    %3 = vector.extract_strided_slice %0 {offsets = [0, 0], sizes = [1, 256], strides = [1, 1]} : vector<2x256xf32> to vector<1x256xf32>
    %4 = vector.broadcast %2 : vector<20x1xf32> to vector<20x256xf32>
    %5 = vector.broadcast %3 : vector<1x256xf32> to vector<20x256xf32>
    %6 = arith.mulf %4, %5 : vector<20x256xf32>
    %7 = vector.broadcast %1 : vector<20x1xf32> to vector<20x256xf32>
    %8 = arith.addf %7, %6 : vector<20x256xf32>
    %c0_5 = arith.constant 0 : index
    %c1 = arith.constant 1 : index
    %9 = vector.load %arg2[%c0_5, %c1] : memref<20x2xf32, #tpu.memory_space<vmem>>, vector<20x1xf32>
    %10 = vector.extract_strided_slice %0 {offsets = [1, 0], sizes = [1, 256], strides = [1, 1]} : vector<2x256xf32> to vector<1x256xf32>
    %11 = vector.broadcast %9 : vector<20x1xf32> to vector<20x256xf32>
    %12 = vector.broadcast %10 : vector<1x256xf32> to vector<20x256xf32>
    %13 = arith.mulf %11, %12 : vector<20x256xf32>
    %14 = arith.addf %8, %13 : vector<20x256xf32>
    %cst = arith.constant 5.000000e-01 : f32
    %15 = vector.broadcast %cst : f32 to vector<20x256xf32>
    %16 = arith.mulf %15, %14 : vector<20x256xf32>
    %cst_6 = arith.constant 5.000000e-01 : f32
    %17 = vector.broadcast %cst_6 : f32 to vector<20x256xf32>
    %18 = arith.mulf %17, %14 : vector<20x256xf32>
    %19 = math.tanh %18 : vector<20x256xf32>
    %cst_7 = arith.constant 1.000000e+00 : f32
    %20 = vector.broadcast %cst_7 : f32 to vector<20x256xf32>
    %21 = arith.addf %20, %19 : vector<20x256xf32>
    %22 = arith.mulf %16, %21 : vector<20x256xf32>
    %c0_8 = arith.constant 0 : index
    %c0_9 = arith.constant 0 : index
    %23 = vector.load %arg4[%c0_8, %c0_9] : memref<20x100xbf16, #tpu.memory_space<vmem>>, vector<20x100xbf16>
    %c0_10 = arith.constant 0 : index
    %c0_11 = arith.constant 0 : index
    %24 = vector.load %arg5[%c0_10, %c0_11] : memref<20x5xf32, #tpu.memory_space<vmem>>, vector<20x5xf32>
    %25 = vector.extract_strided_slice %23 {offsets = [0, 0], sizes = [20, 20], strides = [1, 1]} : vector<20x100xbf16> to vector<20x20xbf16>
    %26 = arith.truncf %22 : vector<20x256xf32> to vector<20x256xbf16>
    %cst_12 = arith.constant dense<0.000000e+00> : vector<20x256xf32>
    %27 = tpu.matmul %25, %26, %cst_12 {dimension_numbers = #tpu.dot_dimension_numbers<[1], [0], [0], [1], [0, 0, 1, 1], [], []>} : vector<20x20xbf16>, vector<20x256xbf16>, vector<20x256xf32> -> vector<20x256xf32>
    %28 = vector.extract_strided_slice %24 {offsets = [0, 0], sizes = [20, 1], strides = [1, 1]} : vector<20x5xf32> to vector<20x1xf32>
    %29 = vector.broadcast %28 : vector<20x1xf32> to vector<20x256xf32>
    %30 = arith.addf %27, %29 : vector<20x256xf32>
    %cst_13 = arith.constant 5.000000e-01 : f32
    %31 = vector.broadcast %cst_13 : f32 to vector<20x256xf32>
    %32 = arith.mulf %31, %30 : vector<20x256xf32>
    %cst_14 = arith.constant 5.000000e-01 : f32
    %33 = vector.broadcast %cst_14 : f32 to vector<20x256xf32>
    %34 = arith.mulf %33, %30 : vector<20x256xf32>
    %35 = math.tanh %34 : vector<20x256xf32>
    %cst_15 = arith.constant 1.000000e+00 : f32
    %36 = vector.broadcast %cst_15 : f32 to vector<20x256xf32>
    %37 = arith.addf %36, %35 : vector<20x256xf32>
    %38 = arith.mulf %32, %37 : vector<20x256xf32>
    %39 = vector.extract_strided_slice %23 {offsets = [0, 20], sizes = [20, 20], strides = [1, 1]} : vector<20x100xbf16> to vector<20x20xbf16>
    %40 = arith.truncf %38 : vector<20x256xf32> to vector<20x256xbf16>
    %cst_16 = arith.constant dense<0.000000e+00> : vector<20x256xf32>
    %41 = tpu.matmul %39, %40, %cst_16 {dimension_numbers = #tpu.dot_dimension_numbers<[1], [0], [0], [1], [0, 0, 1, 1], [], []>} : vector<20x20xbf16>, vector<20x256xbf16>, vector<20x256xf32> -> vector<20x256xf32>
    %42 = vector.extract_strided_slice %24 {offsets = [0, 1], sizes = [20, 1], strides = [1, 1]} : vector<20x5xf32> to vector<20x1xf32>
    %43 = vector.broadcast %42 : vector<20x1xf32> to vector<20x256xf32>
    %44 = arith.addf %41, %43 : vector<20x256xf32>
    %cst_17 = arith.constant 5.000000e-01 : f32
    %45 = vector.broadcast %cst_17 : f32 to vector<20x256xf32>
    %46 = arith.mulf %45, %44 : vector<20x256xf32>
    %cst_18 = arith.constant 5.000000e-01 : f32
    %47 = vector.broadcast %cst_18 : f32 to vector<20x256xf32>
    %48 = arith.mulf %47, %44 : vector<20x256xf32>
    %49 = math.tanh %48 : vector<20x256xf32>
    %cst_19 = arith.constant 1.000000e+00 : f32
    %50 = vector.broadcast %cst_19 : f32 to vector<20x256xf32>
    %51 = arith.addf %50, %49 : vector<20x256xf32>
    %52 = arith.mulf %46, %51 : vector<20x256xf32>
    %53 = vector.extract_strided_slice %23 {offsets = [0, 40], sizes = [20, 20], strides = [1, 1]} : vector<20x100xbf16> to vector<20x20xbf16>
    %54 = arith.truncf %52 : vector<20x256xf32> to vector<20x256xbf16>
    %cst_20 = arith.constant dense<0.000000e+00> : vector<20x256xf32>
    %55 = tpu.matmul %53, %54, %cst_20 {dimension_numbers = #tpu.dot_dimension_numbers<[1], [0], [0], [1], [0, 0, 1, 1], [], []>} : vector<20x20xbf16>, vector<20x256xbf16>, vector<20x256xf32> -> vector<20x256xf32>
    %56 = vector.extract_strided_slice %24 {offsets = [0, 2], sizes = [20, 1], strides = [1, 1]} : vector<20x5xf32> to vector<20x1xf32>
    %57 = vector.broadcast %56 : vector<20x1xf32> to vector<20x256xf32>
    %58 = arith.addf %55, %57 : vector<20x256xf32>
    %cst_21 = arith.constant 5.000000e-01 : f32
    %59 = vector.broadcast %cst_21 : f32 to vector<20x256xf32>
    %60 = arith.mulf %59, %58 : vector<20x256xf32>
    %cst_22 = arith.constant 5.000000e-01 : f32
    %61 = vector.broadcast %cst_22 : f32 to vector<20x256xf32>
    %62 = arith.mulf %61, %58 : vector<20x256xf32>
    %63 = math.tanh %62 : vector<20x256xf32>
    %cst_23 = arith.constant 1.000000e+00 : f32
    %64 = vector.broadcast %cst_23 : f32 to vector<20x256xf32>
    %65 = arith.addf %64, %63 : vector<20x256xf32>
    %66 = arith.mulf %60, %65 : vector<20x256xf32>
    %67 = vector.extract_strided_slice %23 {offsets = [0, 60], sizes = [20, 20], strides = [1, 1]} : vector<20x100xbf16> to vector<20x20xbf16>
    %68 = arith.truncf %66 : vector<20x256xf32> to vector<20x256xbf16>
    %cst_24 = arith.constant dense<0.000000e+00> : vector<20x256xf32>
    %69 = tpu.matmul %67, %68, %cst_24 {dimension_numbers = #tpu.dot_dimension_numbers<[1], [0], [0], [1], [0, 0, 1, 1], [], []>} : vector<20x20xbf16>, vector<20x256xbf16>, vector<20x256xf32> -> vector<20x256xf32>
    %70 = vector.extract_strided_slice %24 {offsets = [0, 3], sizes = [20, 1], strides = [1, 1]} : vector<20x5xf32> to vector<20x1xf32>
    %71 = vector.broadcast %70 : vector<20x1xf32> to vector<20x256xf32>
    %72 = arith.addf %69, %71 : vector<20x256xf32>
    %cst_25 = arith.constant 5.000000e-01 : f32
    %73 = vector.broadcast %cst_25 : f32 to vector<20x256xf32>
    %74 = arith.mulf %73, %72 : vector<20x256xf32>
    %cst_26 = arith.constant 5.000000e-01 : f32
    %75 = vector.broadcast %cst_26 : f32 to vector<20x256xf32>
    %76 = arith.mulf %75, %72 : vector<20x256xf32>
    %77 = math.tanh %76 : vector<20x256xf32>
    %cst_27 = arith.constant 1.000000e+00 : f32
    %78 = vector.broadcast %cst_27 : f32 to vector<20x256xf32>
    %79 = arith.addf %78, %77 : vector<20x256xf32>
    %80 = arith.mulf %74, %79 : vector<20x256xf32>
    %81 = vector.extract_strided_slice %23 {offsets = [0, 80], sizes = [20, 20], strides = [1, 1]} : vector<20x100xbf16> to vector<20x20xbf16>
    %82 = arith.truncf %80 : vector<20x256xf32> to vector<20x256xbf16>
    %cst_28 = arith.constant dense<0.000000e+00> : vector<20x256xf32>
    %83 = tpu.matmul %81, %82, %cst_28 {dimension_numbers = #tpu.dot_dimension_numbers<[1], [0], [0], [1], [0, 0, 1, 1], [], []>} : vector<20x20xbf16>, vector<20x256xbf16>, vector<20x256xf32> -> vector<20x256xf32>
    %84 = vector.extract_strided_slice %24 {offsets = [0, 4], sizes = [20, 1], strides = [1, 1]} : vector<20x5xf32> to vector<20x1xf32>
    %85 = vector.broadcast %84 : vector<20x1xf32> to vector<20x256xf32>
    %86 = arith.addf %83, %85 : vector<20x256xf32>
    %cst_29 = arith.constant 5.000000e-01 : f32
    %87 = vector.broadcast %cst_29 : f32 to vector<20x256xf32>
    %88 = arith.mulf %87, %86 : vector<20x256xf32>
    %cst_30 = arith.constant 5.000000e-01 : f32
    %89 = vector.broadcast %cst_30 : f32 to vector<20x256xf32>
    %90 = arith.mulf %89, %86 : vector<20x256xf32>
    %91 = math.tanh %90 : vector<20x256xf32>
    %cst_31 = arith.constant 1.000000e+00 : f32
    %92 = vector.broadcast %cst_31 : f32 to vector<20x256xf32>
    %93 = arith.addf %92, %91 : vector<20x256xf32>
    %94 = arith.mulf %88, %93 : vector<20x256xf32>
    %c0_32 = arith.constant 0 : index
    %c0_33 = arith.constant 0 : index
    %95 = vector.load %arg6[%c0_32, %c0_33] : memref<20x1xf32, #tpu.memory_space<vmem>>, vector<20x1xf32>
    %96 = vector.broadcast %95 : vector<20x1xf32> to vector<20x256xf32>
    %97 = arith.mulf %96, %94 : vector<20x256xf32>
    %cst_34 = arith.constant dense<0.000000e+00> : vector<256xf32>
    %98 = vector.multi_reduction <add>, %97, %cst_34 [0] : vector<20x256xf32> to vector<256xf32>
    %99 = vector.shape_cast %98 : vector<256xf32> to vector<1x256xf32>
    %c0_35 = arith.constant 0 : index
    %c0_36 = arith.constant 0 : index
    %100 = vector.load %arg7[%c0_35, %c0_36] : memref<1x1xf32, #tpu.memory_space<vmem>>, vector<1x1xf32>
    %101 = vector.broadcast %100 : vector<1x1xf32> to vector<1x256xf32>
    %102 = arith.addf %99, %101 : vector<1x256xf32>
    %c0_37 = arith.constant 0 : index
    %c0_38 = arith.constant 0 : index
    %103 = vector.load %arg8[%c0_37, %c0_38] : memref<1x256xf32, #tpu.memory_space<vmem>>, vector<1x256xf32>
    tpu.vector_store %arg8[%c0_37, %c0_38], %102 {strides = array<i32>} : memref<1x256xf32, #tpu.memory_space<vmem>>, vector<1x256xf32>,
    return
  }
  func.func @transform_0(%arg0: i32) -> (i32, i32) {
    %c0_i32 = arith.constant 0 : i32
    %c0_i32_0 = arith.constant 0 : i32
    return %c0_i32, %arg0 : i32, i32
  }
  func.func @transform_1(%arg0: i32) -> (i32, i32) {
    %c0_i32 = arith.constant 0 : i32
    %c0_i32_0 = arith.constant 0 : i32
    %c0_i32_1 = arith.constant 0 : i32
    return %c0_i32, %c0_i32_0 : i32, i32
  }
  func.func @transform_2(%arg0: i32) -> (i32, i32) {
    %c0_i32 = arith.constant 0 : i32
    %c0_i32_0 = arith.constant 0 : i32
    %c0_i32_1 = arith.constant 0 : i32
    return %c0_i32, %c0_i32_0 : i32, i32
  }
  func.func @transform_3(%arg0: i32) -> (i32, i32) {
    %c0_i32 = arith.constant 0 : i32
    %c0_i32_0 = arith.constant 0 : i32
    %c0_i32_1 = arith.constant 0 : i32
    return %c0_i32, %c0_i32_0 : i32, i32
  }
  func.func @transform_4(%arg0: i32) -> (i32, i32) {
    %c0_i32 = arith.constant 0 : i32
    %c0_i32_0 = arith.constant 0 : i32
    %c0_i32_1 = arith.constant 0 : i32
    return %c0_i32, %c0_i32_0 : i32, i32
  }
  func.func @transform_5(%arg0: i32) -> (i32, i32) {
    %c0_i32 = arith.constant 0 : i32
    %c0_i32_0 = arith.constant 0 : i32
    %c0_i32_1 = arith.constant 0 : i32
    return %c0_i32, %c0_i32_0 : i32, i32
  }
  func.func @transform_6(%arg0: i32) -> (i32, i32) {
    %c0_i32 = arith.constant 0 : i32
    %c0_i32_0 = arith.constant 0 : i32
    %c0_i32_1 = arith.constant 0 : i32
    return %c0_i32, %c0_i32_0 : i32, i32
  }
  func.func @transform_7(%arg0: i32) -> (i32, i32) {
    %c0_i32 = arith.constant 0 : i32
    %c0_i32_0 = arith.constant 0 : i32
    return %c0_i32, %arg0 : i32, i32
  }
}

</mosaic_0001>

<llo_original>
// kernel: ffn_forward.1
$region0: #{ffn_forward.1}
  #allocation0 [shape = 'u32[]', space=smem, size = 0x4, offset = 0x4, fixed_abs, tag = 'smem constant byte address 0x4 - core index']
  #allocation1 [shape = 'u32[72,128]{1,0:T(1,128)}', space=vmem, size = 0x9000, scoped, tag = 'internal scratch']
  #allocation2 [shape = 'f32[1,1]{1,0:T(1,128)S(1)}', space=vmem, size = 0x200, scoped, tag = 'scoped memory for ffn_forward.1']
  %s0 = inlined_call_operand.vmem [shape: f32[2,512], index: 0, kind: input, shape index: {}]
  %s1 = inlined_call_operand.vmem [shape: f32[20,2], index: 1, kind: input, shape index: {}]
  %s2 = inlined_call_operand.vmem [shape: f32[20,1], index: 2, kind: input, shape index: {}]
  %s3 = inlined_call_operand.vmem [shape: bf16[20,100], index: 3, kind: input, shape index: {}]
  %s4 = inlined_call_operand.vmem [shape: f32[20,5], index: 4, kind: input, shape index: {}]
  %s5 = inlined_call_operand.vmem [shape: f32[20,1], index: 5, kind: input, shape index: {}]
  %s6 = inlined_call_operand.<no memory space> [shape: f32[1,1], index: 6, kind: input, shape index: {}]
  %s7 = inlined_call_operand.vmem [shape: f32[1,512], index: 7, kind: output, shape index: {}]
  %s8 = sld [smem:[#allocation0]]
  $region61: #{ffn_forward.1} parent=0
    _
  %s10 = ssub.s32 1, %s8
  %s11 = scalar_select 0, %s10, %s8
  %v12 = vstv %s6
  %13 = vst [vmem:[#allocation2] sm:$0x1] %v12
  loop: start=0, step=1, limit=4
  $region2: #{ffn_forward.1} parent=0 // loop_pre_header
    _
  $region3: #{ffn_forward.1} parent=0 // loop_header
    %s15 = sphi 0, %s19
    %p16 = scmp.ge.s32.totalorder %s15, 4
    %s25 = sphi 0, %s27
    %s28 = sphi 0, %s25
    %s29 = sphi 0, %s28
    %s45 = sphi 0, %s29
    %s49 = sphi 0, %s49
    %s51 = sphi 0, %s49
    %s52 = sphi 0, %s51
    %s66 = sphi 0, %s52
    %s70 = sphi 0, %s70
    %s72 = sphi 0, %s70
    %s73 = sphi 0, %s72
    %s87 = sphi 0, %s73
    %s91 = sphi 0, %s91
    %s93 = sphi 0, %s91
    %s94 = sphi 0, %s93
    %s108 = sphi 0, %s94
    %s112 = sphi 0, %s112
    %s114 = sphi 0, %s112
    %s115 = sphi 0, %s114
    %s129 = sphi 0, %s115
    %s133 = sphi 0, %s133
    %s135 = sphi 0, %s133
    %s136 = sphi 0, %s135
    %s150 = sphi 0, %s136
    %s154 = sphi 0, %s154
    %s156 = sphi 0, %s154
    %s157 = sphi 0, %s156
    %s171 = sphi 0, %s157
    %s177 = sphi 0, %s179
    %s180 = sphi 0, %s177
    %s181 = sphi 0, %s180
    %s197 = sphi 0, %s181
  $region4: #{ffn_forward.1} parent=0 // loop_header_branch
    %18 = sbr.rel (%p16) target = $region8
  $region5: #{ffn_forward.1} parent=0 // loop_body
    %s20 = ssub.s32 %s15, 1
    %s21 = ssub.s32 %s15, 2
    %s22 = sadd.s32 %s15, 1
    %s23 = ssub.s32 %s15, %s22
    %p24 = scmp.eq.s32.totalorder %s23, 0
    %s26 = sadd.s32 %s25, 1
    %s27 = scalar_select %p24, %s25, %s26
    %p30 = pneg %p24
    %p31 = scmp.eq.s32.totalorder %s15, 1
    %p32 = por %p30, %p31
    %p33 = scmp.ne.s32.totalorder %s25, %s28
    %p34 = scmp.eq.s32.totalorder %s15, 0
    %p35 = por %p33, %p34
    %p36 = scmp.ne.s32.totalorder %s25, %s28
    %p37 = scmp.eq.s32.totalorder %s20, 1
    %p38 = por %p36, %p37
    %p39 = scmp.ne.s32.totalorder %s28, %s29
    %p40 = scmp.eq.s32.totalorder %s20, 0
    %p41 = por %p39, %p40
    %p42 = scmp.ne.s32.totalorder %s28, %s29
    %p43 = scmp.eq.s32.totalorder %s21, 1
    %p44 = por %p42, %p43
    %p46 = scmp.ne.s32.totalorder %s29, %s45
    %p47 = scmp.eq.s32.totalorder %s21, 0
    %p48 = por %p46, %p47
    %s50 = sadd.s32 %s49, 1
    %p53 = scmp.eq.s32.totalorder %s15, 1
    %p54 = scmp.ne.s32.totalorder %s49, %s51
    %p55 = scmp.eq.s32.totalorder %s15, 0
    %p56 = por %p54, %p55
    %p57 = scmp.ne.s32.totalorder %s49, %s51
    %p58 = scmp.eq.s32.totalorder %s20, 1
    %p59 = por %p57, %p58
    %p60 = scmp.ne.s32.totalorder %s51, %s52
    %p61 = scmp.eq.s32.totalorder %s20, 0
    %p62 = por %p60, %p61
    %p63 = scmp.ne.s32.totalorder %s51, %s52
    %p64 = scmp.eq.s32.totalorder %s21, 1
    %p65 = por %p63, %p64
    %p67 = scmp.ne.s32.totalorder %s52, %s66
    %p68 = scmp.eq.s32.totalorder %s21, 0
    %p69 = por %p67, %p68
    %s71 = sadd.s32 %s70, 1
    %p74 = scmp.eq.s32.totalorder %s15, 1
    %p75 = scmp.ne.s32.totalorder %s70, %s72
    %p76 = scmp.eq.s32.totalorder %s15, 0
    %p77 = por %p75, %p76
    %p78 = scmp.ne.s32.totalorder %s70, %s72
    %p79 = scmp.eq.s32.totalorder %s20, 1
    %p80 = por %p78, %p79
    %p81 = scmp.ne.s32.totalorder %s72, %s73
    %p82 = scmp.eq.s32.totalorder %s20, 0
    %p83 = por %p81, %p82
    %p84 = scmp.ne.s32.totalorder %s72, %s73
    %p85 = scmp.eq.s32.totalorder %s21, 1
    %p86 = por %p84, %p85
    %p88 = scmp.ne.s32.totalorder %s73, %s87
    %p89 = scmp.eq.s32.totalorder %s21, 0
    %p90 = por %p88, %p89
    %s92 = sadd.s32 %s91, 1
    %p95 = scmp.eq.s32.totalorder %s15, 1
    %p96 = scmp.ne.s32.totalorder %s91, %s93
    %p97 = scmp.eq.s32.totalorder %s15, 0
    %p98 = por %p96, %p97
    %p99 = scmp.ne.s32.totalorder %s91, %s93
    %p100 = scmp.eq.s32.totalorder %s20, 1
    %p101 = por %p99, %p100
    %p102 = scmp.ne.s32.totalorder %s93, %s94
    %p103 = scmp.eq.s32.totalorder %s20, 0
    %p104 = por %p102, %p103
    %p105 = scmp.ne.s32.totalorder %s93, %s94
    %p106 = scmp.eq.s32.totalorder %s21, 1
    %p107 = por %p105, %p106
    %p109 = scmp.ne.s32.totalorder %s94, %s108
    %p110 = scmp.eq.s32.totalorder %s21, 0
    %p111 = por %p109, %p110
    %s113 = sadd.s32 %s112, 1
    %p116 = scmp.eq.s32.totalorder %s15, 1
    %p117 = scmp.ne.s32.totalorder %s112, %s114
    %p118 = scmp.eq.s32.totalorder %s15, 0
    %p119 = por %p117, %p118
    %p120 = scmp.ne.s32.totalorder %s112, %s114
    %p121 = scmp.eq.s32.totalorder %s20, 1
    %p122 = por %p120, %p121
    %p123 = scmp.ne.s32.totalorder %s114, %s115
    %p124 = scmp.eq.s32.totalorder %s20, 0
    %p125 = por %p123, %p124
    %p126 = scmp.ne.s32.totalorder %s114, %s115
    %p127 = scmp.eq.s32.totalorder %s21, 1
    %p128 = por %p126, %p127
    %p130 = scmp.ne.s32.totalorder %s115, %s129
    %p131 = scmp.eq.s32.totalorder %s21, 0
    %p132 = por %p130, %p131
    %s134 = sadd.s32 %s133, 1
    %p137 = scmp.eq.s32.totalorder %s15, 1
    %p138 = scmp.ne.s32.totalorder %s133, %s135
    %p139 = scmp.eq.s32.totalorder %s15, 0
    %p140 = por %p138, %p139
    %p141 = scmp.ne.s32.totalorder %s133, %s135
    %p142 = scmp.eq.s32.totalorder %s20, 1
    %p143 = por %p141, %p142
    %p144 = scmp.ne.s32.totalorder %s135, %s136
    %p145 = scmp.eq.s32.totalorder %s20, 0
    %p146 = por %p144, %p145
    %p147 = scmp.ne.s32.totalorder %s135, %s136
    %p148 = scmp.eq.s32.totalorder %s21, 1
    %p149 = por %p147, %p148
    %p151 = scmp.ne.s32.totalorder %s136, %s150
    %p152 = scmp.eq.s32.totalorder %s21, 0
    %p153 = por %p151, %p152
    %s155 = sadd.s32 %s154, 1
    %p158 = scmp.eq.s32.totalorder %s15, 1
    %p159 = scmp.ne.s32.totalorder %s154, %s156
    %p160 = scmp.eq.s32.totalorder %s15, 0
    %p161 = por %p159, %p160
    %p162 = scmp.ne.s32.totalorder %s154, %s156
    %p163 = scmp.eq.s32.totalorder %s20, 1
    %p164 = por %p162, %p163
    %p165 = scmp.ne.s32.totalorder %s156, %s157
    %p166 = scmp.eq.s32.totalorder %s20, 0
    %p167 = por %p165, %p166
    %p168 = scmp.ne.s32.totalorder %s156, %s157
    %p169 = scmp.eq.s32.totalorder %s21, 1
    %p170 = por %p168, %p169
    %p172 = scmp.ne.s32.totalorder %s157, %s171
    %p173 = scmp.eq.s32.totalorder %s21, 0
    %p174 = por %p172, %p173
    %s175 = ssub.s32 %s15, %s22
    %p176 = scmp.eq.s32.totalorder %s175, 0
    %s178 = sadd.s32 %s177, 1
    %s179 = scalar_select %p176, %s177, %s178
    %p182 = pneg %p176
    %p183 = scmp.eq.s32.totalorder %s15, 1
    %p184 = por %p182, %p183
    %p185 = scmp.ne.s32.totalorder %s177, %s180
    %p186 = scmp.eq.s32.totalorder %s15, 0
    %p187 = por %p185, %p186
    %p188 = scmp.ne.s32.totalorder %s177, %s180
    %p189 = scmp.eq.s32.totalorder %s20, 1
    %p190 = por %p188, %p189
    %p191 = scmp.ne.s32.totalorder %s180, %s181
    %p192 = scmp.eq.s32.totalorder %s20, 0
    %p193 = por %p191, %p192
    %p194 = scmp.ne.s32.totalorder %s180, %s181
    %p195 = scmp.eq.s32.totalorder %s21, 1
    %p196 = por %p194, %p195
    %p198 = scmp.ne.s32.totalorder %s181, %s197
    %p199 = scmp.eq.s32.totalorder %s21, 0
    %p200 = por %p198, %p199
    %p201 = scmp.le.s32.totalorder 1, %s15
    %p202 = scmp.lt.s32.totalorder %s15, 3
    %p203 = pnand %p201, %p202
    %p204 = pneg %p203
    // Predicated region
    $region9: #{ffn_forward.1} parent=5 // pred_check
      _
    $region10: #{ffn_forward.1} parent=5 // pred_check_branch
      %206 = sbr.rel (%p203) target = $region12
    $region11: #{ffn_forward.1} parent=5 // pred_region
      %s207 = ssub.s32 %s15, 1
      // Predicated region
      $region13: #{ffn_forward.1} parent=11 // pred_check
        %p208 = pneg %p62
      $region14: #{ffn_forward.1} parent=11 // pred_check_branch
        %210 = sbr.rel (%p208) target = $region16
      $region15: #{ffn_forward.1} parent=11 // pred_region
        _
      $region16: #{ffn_forward.1} parent=11 // pred_fallthru
        _
      // Predicated region
      $region17: #{ffn_forward.1} parent=11 // pred_check
        %p211 = pneg %p83
      $region18: #{ffn_forward.1} parent=11 // pred_check_branch
        %213 = sbr.rel (%p211) target = $region20
      $region19: #{ffn_forward.1} parent=11 // pred_region
        _
      $region20: #{ffn_forward.1} parent=11 // pred_fallthru
        _
      // Predicated region
      $region21: #{ffn_forward.1} parent=11 // pred_check
        %p214 = pneg %p104
      $region22: #{ffn_forward.1} parent=11 // pred_check_branch
        %216 = sbr.rel (%p214) target = $region24
      $region23: #{ffn_forward.1} parent=11 // pred_region
        _
      $region24: #{ffn_forward.1} parent=11 // pred_fallthru
        _
      // Predicated region
      $region25: #{ffn_forward.1} parent=11 // pred_check
        %p217 = pneg %p125
      $region26: #{ffn_forward.1} parent=11 // pred_check_branch
        %219 = sbr.rel (%p217) target = $region28
      $region27: #{ffn_forward.1} parent=11 // pred_region
        _
      $region28: #{ffn_forward.1} parent=11 // pred_fallthru
        _
      // Predicated region
      $region29: #{ffn_forward.1} parent=11 // pred_check
        %p220 = pneg %p146
      $region30: #{ffn_forward.1} parent=11 // pred_check_branch
        %222 = sbr.rel (%p220) target = $region32
      $region31: #{ffn_forward.1} parent=11 // pred_region
        _
      $region32: #{ffn_forward.1} parent=11 // pred_fallthru
        _
      // Predicated region
      $region33: #{ffn_forward.1} parent=11 // pred_check
        %p223 = pneg %p167
      $region34: #{ffn_forward.1} parent=11 // pred_check_branch
        %225 = sbr.rel (%p223) target = $region36
      $region35: #{ffn_forward.1} parent=11 // pred_region
        _
      $region36: #{ffn_forward.1} parent=11 // pred_fallthru
        _
    $region12: #{ffn_forward.1} parent=5 // pred_fallthru
      _
    %p226 = scmp.lt.s32.totalorder %s15, 2
    // Predicated region
    $region37: #{ffn_forward.1} parent=5 // pred_check
      %p227 = pneg %p226
    $region38: #{ffn_forward.1} parent=5 // pred_check_branch
      %229 = sbr.rel (%p227) target = $region40
    $region39: #{ffn_forward.1} parent=5 // pred_region
      // Predicated region
      $region41: #{ffn_forward.1} parent=39 // pred_check
        %p230 = pneg %p35
      $region42: #{ffn_forward.1} parent=39 // pred_check_branch
        %232 = sbr.rel (%p230) target = $region44
      $region43: #{ffn_forward.1} parent=39 // pred_region
        %s233 = smul.u32 2, %s15
        %p234 = scmp.lt.s32.totalorder %s233, 3
        %s235 = scalar_select %p234, %s233, 3
        %s236 = smul.addr %s235, 2
        %s237 = scalar_lea.vmem %s0, %s236
        %s238 = smul.u32 2, %s15
      $region44: #{ffn_forward.1} parent=39 // pred_fallthru
        _
    $region40: #{ffn_forward.1} parent=5 // pred_fallthru
      _
    %p239 = scmp.le.s32.totalorder 1, %s15
    %p240 = scmp.lt.s32.totalorder %s15, 3
    %p241 = pnand %p239, %p240
    %p242 = pneg %p241
    // Predicated region
    $region45: #{ffn_forward.1} parent=5 // pred_check
      _
    $region46: #{ffn_forward.1} parent=5 // pred_check_branch
      %244 = sbr.rel (%p241) target = $region48
    $region47: #{ffn_forward.1} parent=5 // pred_region
      %s245 = ssub.s32 %s15, 1
      %s246 = smul.u32 2, %s20
      %p247 = scmp.lt.s32.totalorder %s246, 3
      %s248 = scalar_select %p247, %s246, 3
      %s249 = smul.addr %s248, 2
      %s250 = scalar_lea.vmem %s0, %s249
      %p251 = pneg %p41
      %p252 = pneg %p38
      %p253 = pneg %p62
      %p254 = pneg %p59
      %p255 = pneg %p83
      %p256 = pneg %p80
      %p257 = pneg %p104
      %p258 = pneg %p101
      %p259 = pneg %p125
      %p260 = pneg %p122
      %p261 = pneg %p146
      %p262 = pneg %p143
      %p263 = pneg %p167
      %p264 = pneg %p164
      %p265 = pneg %p193
      %p266 = pneg %p190
      %s267 = smul.u32 2, %s20
      %p268 = scmp.lt.s32.totalorder %s267, 3
      %s269 = scalar_select %p268, %s267, 3
      %s270 = scalar_lea.vmem %s7, %s269
      %s271 = smul.u32 2, %s20
      %p272 = scmp.lt.s32.totalorder %s271, 3
      %s273 = scalar_select %p272, %s271, 3
      %s274 = smul.addr %s273, 2
      %s275 = scalar_lea.vmem %s0, %s274
      %s276 = smul.u32 2, %s20
      %s277 = smul.u32 2, %s20
      %p278 = scmp.lt.s32.totalorder %s277, 3
      %s279 = scalar_select %p278, %s277, 3
      %s280 = scalar_lea.vmem %s7, %s279
      %s281 = smul.u32 2, %s20
      %v283 = vld [vmem:[%s275] sm:$0xf]
      %v284 = vld [vmem:[%s2] sm:$0xff]
      %v285 = vld [vmem:[%s2 + $0x8] sm:$0xff]
      %v286 = vld [vmem:[%s2 + $0x10] sm:$0xf]
      %v287 = vld [vmem:[%s1] sm:$0xff]
      %v288 = vld [vmem:[%s1 + $0x8] sm:$0xff]
      %v289 = vld [vmem:[%s1 + $0x10] sm:$0xf]
      %291 = vset.pattern.permute.xlu0 0
      %292 = vperm.xlu0 %291, %v287
      %v293 = vpop.permute.xlu0 %292
      %296 = vset.pattern.permute.xlu0 0
      %297 = vperm.xlu0 %296, %v288
      %v298 = vpop.permute.xlu0 %297
      %301 = vset.pattern.permute.xlu0 0
      %302 = vperm.xlu0 %301, %v289
      %v303 = vpop.permute.xlu0 %302
      %v306 = vperm.slane %v283, 0
      %v307 = vperm.slane %v283, 2
      %v310 = vperm.slane %v306, 0
      %v311 = vperm.slane %v307, 0
      %v312 = vmul.f32 %v293, %v310
      %v313 = vmul.f32 %v293, %v311
      %v314 = vmul.f32 %v298, %v310
      %v315 = vmul.f32 %v298, %v311
      %v316 = vmul.f32 %v303, %v310
      %v317 = vmul.f32 %v303, %v311
      %319 = vset.pattern.permute.xlu0 0
      %320 = vperm.xlu0 %319, %v284
      %v321 = vpop.permute.xlu0 %320
      %324 = vset.pattern.permute.xlu0 0
      %325 = vperm.xlu0 %324, %v285
      %v326 = vpop.permute.xlu0 %325
      %329 = vset.pattern.permute.xlu0 0
      %330 = vperm.xlu0 %329, %v286
      %v331 = vpop.permute.xlu0 %330
      %v333 = vadd.f32 %v321, %v312
      %v334 = vadd.f32 %v321, %v313
      %v335 = vadd.f32 %v326, %v314
      %v336 = vadd.f32 %v326, %v315
      %v337 = vadd.f32 %v331, %v316
      %v338 = vadd.f32 %v331, %v317
      %339 = vset.pattern.permute.xlu0 1
      %340 = vperm.xlu0 %339, %v287
      %v341 = vpop.permute.xlu0 %340
      %343 = vset.pattern.permute.xlu0 1
      %344 = vperm.xlu0 %343, %v288
      %v345 = vpop.permute.xlu0 %344
      %347 = vset.pattern.permute.xlu0 1
      %348 = vperm.xlu0 %347, %v289
      %v349 = vpop.permute.xlu0 %348
      %v351 = vperm.slane %v283, 1
      %v352 = vperm.slane %v283, 3
      %v355 = vperm.slane %v351, 1
      %v356 = vperm.slane %v352, 1
      %v357 = vmul.f32 %v341, %v355
      %v358 = vmul.f32 %v341, %v356
      %v359 = vmul.f32 %v345, %v355
      %v360 = vmul.f32 %v345, %v356
      %v361 = vmul.f32 %v349, %v355
      %v362 = vmul.f32 %v349, %v356
      %v363 = vadd.f32 %v333, %v357
      %v364 = vadd.f32 %v334, %v358
      %v365 = vadd.f32 %v335, %v359
      %v366 = vadd.f32 %v336, %v360
      %v367 = vadd.f32 %v337, %v361
      %v368 = vadd.f32 %v338, %v362
      %v369 = vmul.f32 %v363, 0.5
      %v370 = vmul.f32 %v364, 0.5
      %v371 = vmul.f32 %v365, 0.5
      %v372 = vmul.f32 %v366, 0.5
      %v373 = vmul.f32 %v367, 0.5
      %v374 = vmul.f32 %v368, 0.5
      %v375 = vtanh.pop %v369
      %v376 = vtanh.pop %v370
      %v377 = vtanh.pop %v371
      %v378 = vtanh.pop %v372
      %v379 = vtanh.pop %v373
      %v380 = vtanh.pop %v374
      %v381 = vadd.f32 %v375, 1.0
      %v382 = vadd.f32 %v376, 1.0
      %v383 = vadd.f32 %v377, 1.0
      %v384 = vadd.f32 %v378, 1.0
      %v385 = vadd.f32 %v379, 1.0
      %v386 = vadd.f32 %v380, 1.0
      %v387 = vmul.f32 %v369, %v381
      %v388 = vmul.f32 %v370, %v382
      %v389 = vmul.f32 %v371, %v383
      %v390 = vmul.f32 %v372, %v384
      %v391 = vmul.f32 %v373, %v385
      %v392 = vmul.f32 %v374, %v386
      %v393 = vld [vmem:[%s3] sm:$0xf]
      %v394 = vld [vmem:[%s3 + $0x4] sm:$0xf]
      %v395 = vld [vmem:[%s3 + $0x8] sm:$0x3]
      %v396 = vld [vmem:[%s4] sm:$0xff]
      %v397 = vld [vmem:[%s4 + $0x8] sm:$0xff]
      %v398 = vld [vmem:[%s4 + $0x10] sm:$0xf]
      %v399 = vpack.c.bf16 %v389, %v387
      %v400 = vpack.c.bf16 %v390, %v388
      %v401 = vpack.c.bf16 %v391, %v391
      %v402 = vpack.c.bf16 %v392, %v392
      %404 = vset.pattern.permute.xlu0 0
      %405 = vperm.xlu0 %404, %v396
      %v406 = vpop.permute.xlu0 %405
      %409 = vset.pattern.permute.xlu0 0
      %410 = vperm.xlu0 %409, %v397
      %v411 = vpop.permute.xlu0 %410
      %414 = vset.pattern.permute.xlu0 0
      %415 = vperm.xlu0 %414, %v398
      %v416 = vpop.permute.xlu0 %415
      %v421 = vunpack.c.l.b16 %v393
      %v422 = vunpack.c.l.b16 %v394
      %v423 = vunpack.c.l.b16 %v395
      %v424 = vpack.c.b16 %v422, %v421
      %v425 = vpack.c.b16 %v423, %v423
      %vm426 = vcmask 162816
      %v428 = vsel %vm426, %v424, 0
      %v431 = vsel %vm426, %v425, 0
      %vm433 = vcmask 1041408
      %v435 = vsel %vm433, %v401, 0
      %v438 = vsel %vm433, %v402, 0
      %440 = vmatpush.bf16.msra.mxu0 0
      %441 = vmatpush.bf16.msra.mxu0 0
      %442 = vmatpush.bf16.msra.mxu0 0
      %443 = vmatpush.bf16.msra.mxu0 0
      %444 = vmatpush.bf16.msra.mxu0 0
      %445 = vmatpush.bf16.msra.mxu0 0
      %446 = vmatpush.bf16.msra.mxu0 %v435
      %447 = vmatpush.bf16.msra.mxu0 %v399
      %448 = vmatmul.bf16.gmra.mxu0 %v428
      %v449 = vpop.f32.mrf.mxu0
      %v450 = vadd.f32 %v406, %v449
      %v451 = vpop.f32.mrf.mxu0
      %v452 = vadd.f32 %v411, %v451
      %453 = vmatmul.bf16.gmra.mxu0 %v431
      %v454 = vpop.f32.mrf.mxu0
      %v455 = vadd.f32 %v416, %v454
      %v456 = vpop.f32.mrf.mxu0
      %457 = vdwg.mxu0
      %458 = vmatpush.bf16.msra.mxu0 0
      %459 = vmatpush.bf16.msra.mxu0 0
      %460 = vmatpush.bf16.msra.mxu0 0
      %461 = vmatpush.bf16.msra.mxu0 0
      %462 = vmatpush.bf16.msra.mxu0 0
      %463 = vmatpush.bf16.msra.mxu0 0
      %464 = vmatpush.bf16.msra.mxu0 %v438
      %465 = vmatpush.bf16.msra.mxu0 %v400
      %466 = vmatmul.bf16.gmra.mxu0 %v428
      %v467 = vpop.f32.mrf.mxu0
      %v468 = vadd.f32 %v406, %v467
      %v469 = vpop.f32.mrf.mxu0
      %v470 = vadd.f32 %v411, %v469
      %471 = vmatmul.bf16.gmra.mxu0 %v431
      %v472 = vpop.f32.mrf.mxu0
      %v473 = vadd.f32 %v416, %v472
      %v474 = vpop.f32.mrf.mxu0
      %475 = vdwg.mxu0
      %v476 = vmul.f32 %v450, 0.5
      %v477 = vmul.f32 %v468, 0.5
      %v478 = vmul.f32 %v452, 0.5
      %v479 = vmul.f32 %v470, 0.5
      %v480 = vmul.f32 %v455, 0.5
      %v481 = vmul.f32 %v473, 0.5
      %v482 = vtanh.pop %v476
      %v483 = vtanh.pop %v477
      %v484 = vtanh.pop %v478
      %v485 = vtanh.pop %v479
      %v486 = vtanh.pop %v480
      %v487 = vtanh.pop %v481
      %v488 = vadd.f32 %v482, 1.0
      %v489 = vadd.f32 %v483, 1.0
      %v490 = vadd.f32 %v484, 1.0
      %v491 = vadd.f32 %v485, 1.0
      %v492 = vadd.f32 %v486, 1.0
      %v493 = vadd.f32 %v487, 1.0
      %v494 = vmul.f32 %v476, %v488
      %v495 = vmul.f32 %v477, %v489
      %v496 = vmul.f32 %v478, %v490
      %v497 = vmul.f32 %v479, %v491
      %v498 = vmul.f32 %v480, %v492
      %v499 = vmul.f32 %v481, %v493
      %v500 = vpack.c.bf16 %v496, %v494
      %v501 = vpack.c.bf16 %v497, %v495
      %v502 = vpack.c.bf16 %v498, %v498
      %v503 = vpack.c.bf16 %v499, %v499
      %504 = vset.pattern.permute.xlu0 1
      %505 = vperm.xlu0 %504, %v396
      %v506 = vpop.permute.xlu0 %505
      %508 = vset.pattern.permute.xlu0 1
      %509 = vperm.xlu0 %508, %v397
      %v510 = vpop.permute.xlu0 %509
      %512 = vset.pattern.permute.xlu0 1
      %513 = vperm.xlu0 %512, %v398
      %v514 = vpop.permute.xlu0 %513
      %516 = vrot.lane.b32.xlu0 %v424, 108
      %v517 = vpop.permute.xlu0 %516
      %518 = vrot.lane.b32.xlu0 %v425, 108
      %v519 = vpop.permute.xlu0 %518
      %v521 = vsel %vm426, %v517, 0
      %v524 = vsel %vm426, %v519, 0
      %v527 = vsel %vm433, %v502, 0
      %v530 = vsel %vm433, %v503, 0
      %532 = vmatpush.bf16.msra.mxu0 0
      %533 = vmatpush.bf16.msra.mxu0 0
      %534 = vmatpush.bf16.msra.mxu0 0
      %535 = vmatpush.bf16.msra.mxu0 0
      %536 = vmatpush.bf16.msra.mxu0 0
      %537 = vmatpush.bf16.msra.mxu0 0
      %538 = vmatpush.bf16.msra.mxu0 %v527
      %539 = vmatpush.bf16.msra.mxu0 %v500
      %540 = vmatmul.bf16.gmra.mxu0 %v521
      %v541 = vpop.f32.mrf.mxu0
      %v542 = vadd.f32 %v506, %v541
      %v543 = vpop.f32.mrf.mxu0
      %v544 = vadd.f32 %v510, %v543
      %545 = vmatmul.bf16.gmra.mxu0 %v524
      %v546 = vpop.f32.mrf.mxu0
      %v547 = vadd.f32 %v514, %v546
      %v548 = vpop.f32.mrf.mxu0
      %549 = vdwg.mxu0
      %550 = vmatpush.bf16.msra.mxu0 0
      %551 = vmatpush.bf16.msra.mxu0 0
      %552 = vmatpush.bf16.msra.mxu0 0
      %553 = vmatpush.bf16.msra.mxu0 0
      %554 = vmatpush.bf16.msra.mxu0 0
      %555 = vmatpush.bf16.msra.mxu0 0
      %556 = vmatpush.bf16.msra.mxu0 %v530
      %557 = vmatpush.bf16.msra.mxu0 %v501
      %558 = vmatmul.bf16.gmra.mxu0 %v521
      %v559 = vpop.f32.mrf.mxu0
      %v560 = vadd.f32 %v506, %v559
      %v561 = vpop.f32.mrf.mxu0
      %v562 = vadd.f32 %v510, %v561
      %563 = vmatmul.bf16.gmra.mxu0 %v524
      %v564 = vpop.f32.mrf.mxu0
      %v565 = vadd.f32 %v514, %v564
      %v566 = vpop.f32.mrf.mxu0
      %567 = vdwg.mxu0
      %v568 = vmul.f32 %v542, 0.5
      %v569 = vmul.f32 %v560, 0.5
      %v570 = vmul.f32 %v544, 0.5
      %v571 = vmul.f32 %v562, 0.5
      %v572 = vmul.f32 %v547, 0.5
      %v573 = vmul.f32 %v565, 0.5
      %v574 = vtanh.pop %v568
      %v575 = vtanh.pop %v569
      %v576 = vtanh.pop %v570
      %v577 = vtanh.pop %v571
      %v578 = vtanh.pop %v572
      %v579 = vtanh.pop %v573
      %v580 = vadd.f32 %v574, 1.0
      %v581 = vadd.f32 %v575, 1.0
      %v582 = vadd.f32 %v576, 1.0
      %v583 = vadd.f32 %v577, 1.0
      %v584 = vadd.f32 %v578, 1.0
      %v585 = vadd.f32 %v579, 1.0
      %v586 = vmul.f32 %v568, %v580
      %v587 = vmul.f32 %v569, %v581
      %v588 = vmul.f32 %v570, %v582
      %v589 = vmul.f32 %v571, %v583
      %v590 = vmul.f32 %v572, %v584
      %v591 = vmul.f32 %v573, %v585
      %v592 = vpack.c.bf16 %v588, %v586
      %v593 = vpack.c.bf16 %v589, %v587
      %v594 = vpack.c.bf16 %v590, %v590
      %v595 = vpack.c.bf16 %v591, %v591
      %596 = vset.pattern.permute.xlu0 2
      %597 = vperm.xlu0 %596, %v396
      %v598 = vpop.permute.xlu0 %597
      %600 = vset.pattern.permute.xlu0 2
      %601 = vperm.xlu0 %600, %v397
      %v602 = vpop.permute.xlu0 %601
      %604 = vset.pattern.permute.xlu0 2
      %605 = vperm.xlu0 %604, %v398
      %v606 = vpop.permute.xlu0 %605
      %608 = vrot.lane.b32.xlu0 %v424, 88
      %v609 = vpop.permute.xlu0 %608
      %610 = vrot.lane.b32.xlu0 %v425, 88
      %v611 = vpop.permute.xlu0 %610
      %v613 = vsel %vm426, %v609, 0
      %v616 = vsel %vm426, %v611, 0
      %v619 = vsel %vm433, %v594, 0
      %v622 = vsel %vm433, %v595, 0
      %624 = vmatpush.bf16.msra.mxu0 0
      %625 = vmatpush.bf16.msra.mxu0 0
      %626 = vmatpush.bf16.msra.mxu0 0
      %627 = vmatpush.bf16.msra.mxu0 0
      %628 = vmatpush.bf16.msra.mxu0 0
      %629 = vmatpush.bf16.msra.mxu0 0
      %630 = vmatpush.bf16.msra.mxu0 %v619
      %631 = vmatpush.bf16.msra.mxu0 %v592
      %632 = vmatmul.bf16.gmra.mxu0 %v613
      %v633 = vpop.f32.mrf.mxu0
      %v634 = vadd.f32 %v598, %v633
      %v635 = vpop.f32.mrf.mxu0
      %v636 = vadd.f32 %v602, %v635
      %637 = vmatmul.bf16.gmra.mxu0 %v616
      %v638 = vpop.f32.mrf.mxu0
      %v639 = vadd.f32 %v606, %v638
      %v640 = vpop.f32.mrf.mxu0
      %641 = vdwg.mxu0
      %642 = vmatpush.bf16.msra.mxu0 0
      %643 = vmatpush.bf16.msra.mxu0 0
      %644 = vmatpush.bf16.msra.mxu0 0
      %645 = vmatpush.bf16.msra.mxu0 0
      %646 = vmatpush.bf16.msra.mxu0 0
      %647 = vmatpush.bf16.msra.mxu0 0
      %648 = vmatpush.bf16.msra.mxu0 %v622
      %649 = vmatpush.bf16.msra.mxu0 %v593
      %650 = vmatmul.bf16.gmra.mxu0 %v613
      %v651 = vpop.f32.mrf.mxu0
      %v652 = vadd.f32 %v598, %v651
      %v653 = vpop.f32.mrf.mxu0
      %v654 = vadd.f32 %v602, %v653
      %655 = vmatmul.bf16.gmra.mxu0 %v616
      %v656 = vpop.f32.mrf.mxu0
      %v657 = vadd.f32 %v606, %v656
      %v658 = vpop.f32.mrf.mxu0
      %659 = vdwg.mxu0
      %v660 = vmul.f32 %v634, 0.5
      %v661 = vmul.f32 %v652, 0.5
      %v662 = vmul.f32 %v636, 0.5
      %v663 = vmul.f32 %v654, 0.5
      %v664 = vmul.f32 %v639, 0.5
      %v665 = vmul.f32 %v657, 0.5
      %v666 = vtanh.pop %v660
      %v667 = vtanh.pop %v661
      %v668 = vtanh.pop %v662
      %v669 = vtanh.pop %v663
      %v670 = vtanh.pop %v664
      %v671 = vtanh.pop %v665
      %v672 = vadd.f32 %v666, 1.0
      %v673 = vadd.f32 %v667, 1.0
      %v674 = vadd.f32 %v668, 1.0
      %v675 = vadd.f32 %v669, 1.0
      %v676 = vadd.f32 %v670, 1.0
      %v677 = vadd.f32 %v671, 1.0
      %v678 = vmul.f32 %v660, %v672
      %v679 = vmul.f32 %v661, %v673
      %v680 = vmul.f32 %v662, %v674
      %v681 = vmul.f32 %v663, %v675
      %v682 = vmul.f32 %v664, %v676
      %v683 = vmul.f32 %v665, %v677
      %v684 = vpack.c.bf16 %v680, %v678
      %v685 = vpack.c.bf16 %v681, %v679
      %v686 = vpack.c.bf16 %v682, %v682
      %v687 = vpack.c.bf16 %v683, %v683
      %688 = vset.pattern.permute.xlu0 3
      %689 = vperm.xlu0 %688, %v396
      %v690 = vpop.permute.xlu0 %689
      %692 = vset.pattern.permute.xlu0 3
      %693 = vperm.xlu0 %692, %v397
      %v694 = vpop.permute.xlu0 %693
      %696 = vset.pattern.permute.xlu0 3
      %697 = vperm.xlu0 %696, %v398
      %v698 = vpop.permute.xlu0 %697
      %700 = vrot.lane.b32.xlu0 %v424, 68
      %v701 = vpop.permute.xlu0 %700
      %702 = vrot.lane.b32.xlu0 %v425, 68
      %v703 = vpop.permute.xlu0 %702
      %v705 = vsel %vm426, %v701, 0
      %v708 = vsel %vm426, %v703, 0
      %v711 = vsel %vm433, %v686, 0
      %v714 = vsel %vm433, %v687, 0
      %716 = vmatpush.bf16.msra.mxu0 0
      %717 = vmatpush.bf16.msra.mxu0 0
      %718 = vmatpush.bf16.msra.mxu0 0
      %719 = vmatpush.bf16.msra.mxu0 0
      %720 = vmatpush.bf16.msra.mxu0 0
      %721 = vmatpush.bf16.msra.mxu0 0
      %722 = vmatpush.bf16.msra.mxu0 %v711
      %723 = vmatpush.bf16.msra.mxu0 %v684
      %724 = vmatmul.bf16.gmra.mxu0 %v705
      %v725 = vpop.f32.mrf.mxu0
      %v726 = vadd.f32 %v690, %v725
      %v727 = vpop.f32.mrf.mxu0
      %v728 = vadd.f32 %v694, %v727
      %729 = vmatmul.bf16.gmra.mxu0 %v708
      %v730 = vpop.f32.mrf.mxu0
      %v731 = vadd.f32 %v698, %v730
      %v732 = vpop.f32.mrf.mxu0
      %733 = vdwg.mxu0
      %734 = vmatpush.bf16.msra.mxu0 0
      %735 = vmatpush.bf16.msra.mxu0 0
      %736 = vmatpush.bf16.msra.mxu0 0
      %737 = vmatpush.bf16.msra.mxu0 0
      %738 = vmatpush.bf16.msra.mxu0 0
      %739 = vmatpush.bf16.msra.mxu0 0
      %740 = vmatpush.bf16.msra.mxu0 %v714
      %741 = vmatpush.bf16.msra.mxu0 %v685
      %742 = vmatmul.bf16.gmra.mxu0 %v705
      %v743 = vpop.f32.mrf.mxu0
      %v744 = vadd.f32 %v690, %v743
      %v745 = vpop.f32.mrf.mxu0
      %v746 = vadd.f32 %v694, %v745
      %747 = vmatmul.bf16.gmra.mxu0 %v708
      %v748 = vpop.f32.mrf.mxu0
      %v749 = vadd.f32 %v698, %v748
      %v750 = vpop.f32.mrf.mxu0
      %751 = vdwg.mxu0
      %v752 = vmul.f32 %v726, 0.5
      %v753 = vmul.f32 %v744, 0.5
      %v754 = vmul.f32 %v728, 0.5
      %v755 = vmul.f32 %v746, 0.5
      %v756 = vmul.f32 %v731, 0.5
      %v757 = vmul.f32 %v749, 0.5
      %v758 = vtanh.pop %v752
      %v759 = vtanh.pop %v753
      %v760 = vtanh.pop %v754
      %v761 = vtanh.pop %v755
      %v762 = vtanh.pop %v756
      %v763 = vtanh.pop %v757
      %v764 = vadd.f32 %v758, 1.0
      %v765 = vadd.f32 %v759, 1.0
      %v766 = vadd.f32 %v760, 1.0
      %v767 = vadd.f32 %v761, 1.0
      %v768 = vadd.f32 %v762, 1.0
      %v769 = vadd.f32 %v763, 1.0
      %v770 = vmul.f32 %v752, %v764
      %v771 = vmul.f32 %v753, %v765
      %v772 = vmul.f32 %v754, %v766
      %v773 = vmul.f32 %v755, %v767
      %v774 = vmul.f32 %v756, %v768
      %v775 = vmul.f32 %v757, %v769
      %v776 = vpack.c.bf16 %v772, %v770
      %v777 = vpack.c.bf16 %v773, %v771
      %v778 = vpack.c.bf16 %v774, %v774
      %v779 = vpack.c.bf16 %v775, %v775
      %780 = vset.pattern.permute.xlu0 4
      %781 = vperm.xlu0 %780, %v396
      %v782 = vpop.permute.xlu0 %781
      %784 = vset.pattern.permute.xlu0 4
      %785 = vperm.xlu0 %784, %v397
      %v786 = vpop.permute.xlu0 %785
      %788 = vset.pattern.permute.xlu0 4
      %789 = vperm.xlu0 %788, %v398
      %v790 = vpop.permute.xlu0 %789
      %792 = vrot.lane.b32.xlu0 %v424, 48
      %v793 = vpop.permute.xlu0 %792
      %794 = vrot.lane.b32.xlu0 %v425, 48
      %v795 = vpop.permute.xlu0 %794
      %v797 = vsel %vm426, %v793, 0
      %v800 = vsel %vm426, %v795, 0
      %v803 = vsel %vm433, %v778, 0
      %v806 = vsel %vm433, %v779, 0
      %808 = vmatpush.bf16.msra.mxu0 0
      %809 = vmatpush.bf16.msra.mxu0 0
      %810 = vmatpush.bf16.msra.mxu0 0
      %811 = vmatpush.bf16.msra.mxu0 0
      %812 = vmatpush.bf16.msra.mxu0 0
      %813 = vmatpush.bf16.msra.mxu0 0
      %814 = vmatpush.bf16.msra.mxu0 %v803
      %815 = vmatpush.bf16.msra.mxu0 %v776
      %816 = vmatmul.bf16.gmra.mxu0 %v797
      %v817 = vpop.f32.mrf.mxu0
      %v818 = vadd.f32 %v782, %v817
      %v819 = vpop.f32.mrf.mxu0
      %v820 = vadd.f32 %v786, %v819
      %821 = vmatmul.bf16.gmra.mxu0 %v800
      %v822 = vpop.f32.mrf.mxu0
      %v823 = vadd.f32 %v790, %v822
      %v824 = vpop.f32.mrf.mxu0
      %825 = vdwg.mxu0
      %826 = vmatpush.bf16.msra.mxu0 0
      %827 = vmatpush.bf16.msra.mxu0 0
      %828 = vmatpush.bf16.msra.mxu0 0
      %829 = vmatpush.bf16.msra.mxu0 0
      %830 = vmatpush.bf16.msra.mxu0 0
      %831 = vmatpush.bf16.msra.mxu0 0
      %832 = vmatpush.bf16.msra.mxu0 %v806
      %833 = vmatpush.bf16.msra.mxu0 %v777
      %834 = vmatmul.bf16.gmra.mxu0 %v797
      %v835 = vpop.f32.mrf.mxu0
      %v836 = vadd.f32 %v782, %v835
      %v837 = vpop.f32.mrf.mxu0
      %v838 = vadd.f32 %v786, %v837
      %839 = vmatmul.bf16.gmra.mxu0 %v800
      %v840 = vpop.f32.mrf.mxu0
      %v841 = vadd.f32 %v790, %v840
      %v842 = vpop.f32.mrf.mxu0
      %843 = vdwg.mxu0
      %v844 = vmul.f32 %v818, 0.5
      %v845 = vmul.f32 %v836, 0.5
      %v846 = vmul.f32 %v820, 0.5
      %v847 = vmul.f32 %v838, 0.5
      %v848 = vmul.f32 %v823, 0.5
      %v849 = vmul.f32 %v841, 0.5
      %v850 = vtanh.pop %v844
      %v851 = vtanh.pop %v845
      %v852 = vtanh.pop %v846
      %v853 = vtanh.pop %v847
      %v854 = vtanh.pop %v848
      %v855 = vtanh.pop %v849
      %v856 = vadd.f32 %v850, 1.0
      %v857 = vadd.f32 %v851, 1.0
      %v858 = vadd.f32 %v852, 1.0
      %v859 = vadd.f32 %v853, 1.0
      %v860 = vadd.f32 %v854, 1.0
      %v861 = vadd.f32 %v855, 1.0
      %v862 = vmul.f32 %v844, %v856
      %v863 = vmul.f32 %v845, %v857
      %v864 = vmul.f32 %v846, %v858
      %v865 = vmul.f32 %v847, %v859
      %v866 = vmul.f32 %v848, %v860
      %v867 = vmul.f32 %v849, %v861
      %v868 = vld [vmem:[%s5] sm:$0xff]
      %v869 = vld [vmem:[%s5 + $0x8] sm:$0xff]
      %v870 = vld [vmem:[%s5 + $0x10] sm:$0xf]
      %872 = vset.pattern.permute.xlu0 0
      %873 = vperm.xlu0 %872, %v868
      %v874 = vpop.permute.xlu0 %873
      %877 = vset.pattern.permute.xlu0 0
      %878 = vperm.xlu0 %877, %v869
      %v879 = vpop.permute.xlu0 %878
      %882 = vset.pattern.permute.xlu0 0
      %883 = vperm.xlu0 %882, %v870
      %v884 = vpop.permute.xlu0 %883
      %v886 = vmul.f32 %v874, %v862
      %v887 = vmul.f32 %v874, %v863
      %v888 = vmul.f32 %v879, %v864
      %v889 = vmul.f32 %v879, %v865
      %v890 = vmul.f32 %v884, %v866
      %v891 = vmul.f32 %v884, %v867
      %v892 = vadd.f32 %v886, %v888
      %vm893 = vcmask 1043456
      %v894 = vsel %vm893, %v890, 0.0
      %v895 = vadd.f32 %v892, %v894
      %v896 = vrot.slane %v895, 4
      %v897 = vadd.f32 %v895, %v896
      %v898 = vrot.slane %v897, 2
      %v899 = vadd.f32 %v897, %v898
      %v900 = vrot.slane %v899, 1
      %v901 = vadd.f32 %v899, %v900
      %v902 = vadd.f32 %v887, %v889
      %v903 = vsel %vm893, %v891, 0.0
      %v904 = vadd.f32 %v902, %v903
      %v905 = vrot.slane %v904, 4
      %v906 = vadd.f32 %v904, %v905
      %v907 = vrot.slane %v906, 2
      %v908 = vadd.f32 %v906, %v907
      %v909 = vrot.slane %v908, 1
      %v910 = vadd.f32 %v908, %v909
      %v911 = vld [vmem:[#allocation2] sm:$0x1]
      %913 = vset.pattern.permute.xlu0 0
      %914 = vperm.xlu0 %913, %v911
      %v915 = vpop.permute.xlu0 %914
      %v917 = vperm.slane %v915, 0
      %v918 = vadd.f32 %v901, %v917
      %v919 = vadd.f32 %v910, %v917
      %v922 = vrot.slane %v919, 7
      %vm923 = vcmask 1040384
      %v924 = vsel %vm923, %v918, %v922
      %v926 = vlaneseq
      %vm927 = vcmp.ge.s32.totalorder %v926, 0
      %vm928 = vcmp.lt.s32.totalorder %v926, 256
      %vm929 = vmand %vm927, %vm928
      %930 = vst.msk [vmem:[%s280] sm:$0x3] %vm929, %v924
      %s931 = smul.u32 2, %s20
      %p932 = scmp.lt.s32.totalorder %s931, 3
      %s933 = scalar_select %p932, %s931, 3
      %s934 = scalar_lea.vmem %s7, %s933
      // Predicated region
      $region49: #{ffn_forward.1} parent=47 // pred_check
        %p935 = pneg %p190
      $region50: #{ffn_forward.1} parent=47 // pred_check_branch
        %937 = sbr.rel (%p935) target = $region52
      $region51: #{ffn_forward.1} parent=47 // pred_region
        %s938 = smul.u32 2, %s20
      $region52: #{ffn_forward.1} parent=47 // pred_fallthru
        _
    $region48: #{ffn_forward.1} parent=5 // pred_fallthru
      _
    %p939 = scmp.le.s32.totalorder 2, %s15
    // Predicated region
    $region53: #{ffn_forward.1} parent=5 // pred_check
      %p940 = pneg %p939
    $region54: #{ffn_forward.1} parent=5 // pred_check_branch
      %942 = sbr.rel (%p940) target = $region56
    $region55: #{ffn_forward.1} parent=5 // pred_region
      %s943 = ssub.s32 %s15, 2
      // Predicated region
      $region57: #{ffn_forward.1} parent=55 // pred_check
        %p944 = pneg %p196
      $region58: #{ffn_forward.1} parent=55 // pred_check_branch
        %946 = sbr.rel (%p944) target = $region60
      $region59: #{ffn_forward.1} parent=55 // pred_region
        %s947 = smul.u32 2, %s21
        %p948 = scmp.lt.s32.totalorder %s947, 3
        %s949 = scalar_select %p948, %s947, 3
        %s950 = scalar_lea.vmem %s7, %s949
      $region60: #{ffn_forward.1} parent=55 // pred_fallthru
        _
    $region56: #{ffn_forward.1} parent=5 // pred_fallthru
      _
  $region6: #{ffn_forward.1} parent=0 // loop_footer
    %s19 = sadd.s32 1, %s15
  $region7: #{ffn_forward.1} parent=0 // loop_footer_branch
    %14 = sbr.rel target = $region3
  $region8: #{ffn_forward.1} parent=0 // loop_exit
    _

</llo_original>
